<compile_context>
chip_gen: v6e
topology: v6e:2x2x1
jax: 0.10.0
libtpu: 0.0.40
codegen_flags: <defaults>
</compile_context>

<pallas_src>
import math

import jax
import jax.numpy as jnp
from jax import lax
from jax.experimental import pallas as pl
from jax.experimental.pallas import tpu as pltpu


def autopad(k, p=None, d=1):
    if d > 1:
        k = d * (k - 1) + 1
    if p is None:
        p = k // 2
    return p


def _round_up(x, m):
    return (x + m - 1) // m * m


_LANE = 128
_SUBLANE = 8
_VMEM_STEP_BUDGET = 24 * 1024 * 1024   # per-step block budget (fits v7x's 64 MiB VMEM)
_TARGET_LANES = 2048                   # amortize the ~0.35us per-grid-step overhead


def _act(acc, apply_act):
    if not apply_act:
        return acc
    # SiLU = x * sigmoid(x); exp + approximate reciprocal both live on the EUP slot.
    return acc * pl.reciprocal(1.0 + jnp.exp(-acc), approx=True)


# -----------------------------------------------------------------------------
# k == 1 path: plain channel matmul, fully BlockSpec-pipelined, zero host passes.
# -----------------------------------------------------------------------------
def _forward_k1(x, w2, bias, out_dtype, apply_act):
    N, C1, H, W = x.shape
    C2 = w2.shape[0]
    HW = H * W

    in_bytes = jnp.dtype(x.dtype).itemsize
    out_bytes = jnp.dtype(out_dtype).itemsize
    # double-buffered input + output blocks + f32 accumulator, per output lane
    per_lane = 2 * C1 * in_bytes + 2 * C2 * out_bytes + C2 * 4
    cap = max(_LANE, (_VMEM_STEP_BUDGET // per_lane) // _LANE * _LANE)
    L = min(_round_up(HW, _LANE), 32768, cap)
    HT = pl.cdiv(HW, L)

    xflat = x.reshape(N, C1, HW)            # pure view; stays f32 in HBM

    def kernel(x_ref, w_ref, b_ref, o_ref):
        xw = x_ref[0].astype(jnp.bfloat16)                    # (C1, L)
        acc = jnp.dot(w_ref[...], xw, preferred_element_type=jnp.float32)
        acc = acc + b_ref[...]
        o_ref[0] = _act(acc, apply_act).astype(o_ref.dtype)

    out = pl.pallas_call(
        kernel,
        out_shape=jax.ShapeDtypeStruct((N, C2, HW), out_dtype),
        grid=(N, HT),
        in_specs=[
            pl.BlockSpec((1, C1, L), lambda n, t: (n, 0, t)),
            pl.BlockSpec((C2, C1), lambda n, t: (0, 0)),
            pl.BlockSpec((C2, 1), lambda n, t: (0, 0)),
        ],
        out_specs=pl.BlockSpec((1, C2, L), lambda n, t: (n, 0, t)),
        compiler_params=pltpu.CompilerParams(
            dimension_semantics=("parallel", "parallel"),
            vmem_limit_bytes=64 * 1024 * 1024),
    )(xflat, w2, bias)

    return out.reshape(N, C2, H, W)          # pure view; no transpose, no crop


# -----------------------------------------------------------------------------
# k > 1 path: flattened padded rows on the lane axis, manual double-buffered DMA
# of halo'ed windows, taps folded into the MXU contraction.
# -----------------------------------------------------------------------------
def _select_tile_rows(H, PW, per_lane_bytes):
    """Rows per grid step.  Invariant: either HT == 1 (block last dim equals the
    full array dim) or TILE*PW is a multiple of 128 (lane-dense stores)."""
    H8 = _round_up(H, _SUBLANE)
    cap_rows = max(_SUBLANE,
                   (_VMEM_STEP_BUDGET // (per_lane_bytes * PW)) // _SUBLANE * _SUBLANE)
    if H8 <= cap_rows and H8 * PW <= 16384:
        return H8                                        # whole image in one row-tile
    g = _LANE // math.gcd(PW, _LANE)                     # granularity: (TILE*PW) % 128 == 0
    tile = _round_up(max(g, pl.cdiv(_TARGET_LANES, PW)), g)
    tile = min(tile, max(g, cap_rows // g * g))
    return max(g, tile)


def _forward_halo(x, w2, bias, k, out_dtype, apply_act):
    N, C1, H, W = x.shape
    C2 = w2.shape[0]
    KK = k * k
    p = k // 2
    PW = W + 2 * p
    out_bytes = jnp.dtype(out_dtype).itemsize

    # per-output-lane VMEM: dbl-buf bf16 input window + assembled operand
    # + dbl-buf output block + f32 accumulator
    per_lane = 2 * C1 * 2 + KK * C1 * 2 + 2 * C2 * out_bytes + C2 * 4
    TILE = _select_tile_rows(H, PW, per_lane)
    HT = pl.cdiv(H, TILE)
    L = TILE * PW                              # output lanes per grid step
    WIN = L + (k - 1) * PW + (k - 1)           # input lanes per step (with halo)
    PH = HT * TILE + k                         # padded rows incl. bottom guard rows

    # Single fused pad + cast pass (the only host-side pre-pass); no halo
    # duplication and no window stacking in HBM.
    xpad = jnp.pad(x, ((0, 0), (0, 0), (p, PH - p - H), (p, p)))
    xflat = xpad.reshape(N, C1, PH * PW).astype(jnp.bfloat16)

    def kernel(x_hbm, w_ref, b_ref, o_ref, xbuf, xop, sem):
        n = pl.program_id(0)
        t = pl.program_id(1)
        nt = pl.num_programs(1)
        step = n * nt + t
        last = pl.num_programs(0) * nt - 1
        slot = step % 2

        def issue(nn, tt, sl):
            pltpu.make_async_copy(
                x_hbm.at[nn, :, pl.ds(tt * L, WIN)],
                xbuf.at[sl], sem.at[sl]).start()

        @pl.when(step == 0)
        def _():
            issue(n, t, slot)

        @pl.when(step < last)                   # prefetch next step's window
        def _():
            nxt = step + 1
            issue(nxt // nt, nxt % nt, 1 - slot)

        pltpu.make_async_copy(                  # wait for the current window
            x_hbm.at[0, :, pl.ds(0, WIN)], xbuf.at[slot], sem.at[slot]).wait()

        xw = xbuf.at[slot]                      # (C1, WIN) bf16 view
        # Assemble the (KK*C1, L) operand so the k*k taps become MXU contraction
        # depth instead of KK small dots + VPU adds.
        for ti in range(KK):
            off = (ti // k) * PW + (ti % k)
            xop[pl.ds(ti * C1, C1), :] = xw[:, off:off + L]

        acc = jnp.dot(w_ref[...], xop[...], preferred_element_type=jnp.float32)
        acc = acc + b_ref[...]
        o_ref[0] = _act(acc, apply_act).astype(o_ref.dtype)

    out_flat = pl.pallas_call(
        kernel,
        out_shape=jax.ShapeDtypeStruct((N, C2, HT * L), out_dtype),
        grid=(N, HT),
        in_specs=[
            pl.BlockSpec(memory_space=pl.ANY),                    # raw HBM, manual DMA
            pl.BlockSpec((C2, KK * C1), lambda n, t: (0, 0)),
            pl.BlockSpec((C2, 1), lambda n, t: (0, 0)),
        ],
        out_specs=pl.BlockSpec((1, C2, L), lambda n, t: (n, 0, t)),
        scratch_shapes=[
            pltpu.VMEM((2, C1, WIN), jnp.bfloat16),
            pltpu.VMEM((KK * C1, L), jnp.bfloat16),
            pltpu.SemaphoreType.DMA((2,)),
        ],
        compiler_params=pltpu.CompilerParams(
            # TODO(synk): the manual-DMA prologue assumes sequential grid steps;
            # a megacore-safe (v7x dual-TC) prefetch prologue is not implemented.
            dimension_semantics=("arbitrary", "arbitrary"),
            vmem_limit_bytes=64 * 1024 * 1024),
    )(xflat, w2, bias)

    out = out_flat.reshape(N, C2, HT * TILE, PW)   # pure view (rows are contiguous)
    return out[:, :, :H, :W]                       # crop padded rows / right-pad cols


# -----------------------------------------------------------------------------
# Public forward: SiLU(BN(Conv2d(c1, c2, k, s=1, p=k//2, bias=False)(x)))
# -----------------------------------------------------------------------------
def conv_bn_silu_forward(x, weight, bn_scale, bn_bias, *, k=1, s=1, p=None, g=1, d=1,
                         act=True, out_dtype=None):
    """x: (N,C1,H,W) f32; weight: (C2,C1,k,k); bn_scale/bn_bias: (C2,) eval-mode BN."""
    # TODO(synk): stride > 1, groups > 1, dilation > 1 and even k are not implemented.
    assert s == 1 and g == 1 and d == 1, "only the default s=1, g=1, d=1 path"
    assert k % 2 == 1, "even kernel sizes change output size with p=k//2"
    assert p is None or p == k // 2, "only p=autopad(k) is supported"
    # TODO(synk): for layers with C2 >= 128 a channels-last (spatial-on-sublanes,
    # C2-on-lanes) formulation would fill the MXU better; not implemented here.

    N, C1, H, W = x.shape
    C2 = weight.shape[0]
    out_dtype = x.dtype if out_dtype is None else out_dtype

    # Fold eval-mode BN scale into the conv weight (host/XLA side, tiny).
    w_f = weight.astype(jnp.float32) * bn_scale.astype(jnp.float32)[:, None, None, None]
    bias = bn_bias.reshape(C2, 1).astype(jnp.float32)

    if k == 1:
        w2 = w_f.reshape(C2, C1).astype(jnp.bfloat16)
        return _forward_k1(x, w2, bias, out_dtype, act is True)
    # tap-major weight layout matching the in-kernel operand assembly:
    # w2[co, (di*k+dj)*C1 + ci] = w_f[co, ci, di, dj]
    w2 = jnp.transpose(w_f, (0, 2, 3, 1)).reshape(C2, k * k * C1).astype(jnp.bfloat16)
    return _forward_halo(x, w2, bias, k, out_dtype, act is True)


def conv_bn_silu_reference(x, weight, bn_scale, bn_bias, *, k):
    """Pure-JAX reference with the same bf16 operand rounding as the kernel."""
    p = autopad(k)
    w_f = (weight * bn_scale[:, None, None, None]).astype(jnp.bfloat16)
    y = lax.conv_general_dilated(
        x.astype(jnp.bfloat16).astype(jnp.float32),
        w_f.astype(jnp.float32),
        window_strides=(1, 1), padding=((p, p), (p, p)),
        dimension_numbers=("NCHW", "OIHW", "NCHW"),
        precision=lax.Precision.HIGHEST)
    y = y + bn_bias[None, :, None, None]
    return y * jax.nn.sigmoid(y)


if __name__ == "__main__":
    key = jax.random.PRNGKey(0)
    k_x, k_params = jax.random.split(key)

    N, C1, C2, H, W = 2, 4, 8, 16, 16
    x = jax.random.normal(k_x, (N, C1, H, W), jnp.float32)

    eps = 1e-5
    for k in (1, 3):          # module default k=1, plus the common 3x3 case
        ks = jax.random.split(jax.random.fold_in(k_params, k), 5)
        weight = 0.2 * jax.random.normal(ks[0], (C2, C1, k, k), jnp.float32)
        gamma = 1.0 + 0.1 * jax.random.normal(ks[1], (C2,), jnp.float32)
        beta = 0.05 * jax.random.normal(ks[2], (C2,), jnp.float32)
        mean = 0.1 * jax.random.normal(ks[3], (C2,), jnp.float32)
        var = 0.5 + jnp.abs(jax.random.normal(ks[4], (C2,), jnp.float32))
        bn_scale = gamma / jnp.sqrt(var + eps)
        bn_bias = beta - mean * bn_scale

        out = conv_bn_silu_forward(x, weight, bn_scale, bn_bias, k=k)
        out = jax.block_until_ready(out)
        ref = conv_bn_silu_reference(x, weight, bn_scale, bn_bias, k=k)

        assert out.shape == (N, C2, H, W), out.shape
        err = float(jnp.max(jnp.abs(out - ref)))
        # tolerance budget: bf16 operand rounding + EUP approximate reciprocal in SiLU
        tol = 2e-3 + 8e-3 * float(jnp.max(jnp.abs(ref)))
        assert err < tol, f"k={k}: max abs err {err} (tol {tol})"

    print("KERNEL_OK")
</pallas_src>

<mosaic_0001>
module attributes {stable_mosaic.version = 11 : i64} {
  func.func @kernel(%arg0: i32, %arg1: i32, %arg2: memref<1x4x256xf32, #tpu.memory_space<vmem>>, %arg3: memref<8x4xbf16, #tpu.memory_space<vmem>>, %arg4: memref<8x1xf32, #tpu.memory_space<vmem>>, %arg5: memref<1x8x256xf32, #tpu.memory_space<vmem>>) attributes {dimension_semantics = [#tpu.dimension_semantics<parallel>, #tpu.dimension_semantics<parallel>], iteration_bounds = array<i64: 2, 1>, scalar_prefetch = 0 : i64, scratch_operands = 0 : i64, tpu.core_type = #tpu.core_type<tc>, window_params = [{transform_indices = @transform_0, window_bounds = array<i64: 1, 4, 256>}, {pipeline_mode = #tpu.pipeline_mode<synchronous>, transform_indices = @transform_1, window_bounds = array<i64: 8, 4>}, {pipeline_mode = #tpu.pipeline_mode<synchronous>, transform_indices = @transform_2, window_bounds = array<i64: 8, 1>}, {transform_indices = @transform_3, window_bounds = array<i64: 1, 8, 256>}]} {
    %c0 = arith.constant 0 : index
    %c0_0 = arith.constant 0 : index
    %c0_1 = arith.constant 0 : index
    %0 = vector.load %arg2[%c0, %c0_0, %c0_1] : memref<1x4x256xf32, #tpu.memory_space<vmem>>, vector<1x4x256xf32>
    %1 = vector.shape_cast %0 : vector<1x4x256xf32> to vector<4x256xf32>
    %2 = arith.truncf %1 : vector<4x256xf32> to vector<4x256xbf16>
    %c0_2 = arith.constant 0 : index
    %c0_3 = arith.constant 0 : index
    %3 = vector.load %arg3[%c0_2, %c0_3] : memref<8x4xbf16, #tpu.memory_space<vmem>>, vector<8x4xbf16>
    %cst = arith.constant dense<0.000000e+00> : vector<8x256xf32>
    %4 = tpu.matmul %3, %2, %cst {dimension_numbers = #tpu.dot_dimension_numbers<[1], [0], [0], [1], [0, 0, 1, 1], [], []>} : vector<8x4xbf16>, vector<4x256xbf16>, vector<8x256xf32> -> vector<8x256xf32>
    %c0_4 = arith.constant 0 : index
    %c0_5 = arith.constant 0 : index
    %5 = vector.load %arg4[%c0_4, %c0_5] : memref<8x1xf32, #tpu.memory_space<vmem>>, vector<8x1xf32>
    %6 = vector.broadcast %5 : vector<8x1xf32> to vector<8x256xf32>
    %7 = arith.addf %4, %6 : vector<8x256xf32>
    %cst_6 = arith.constant 0.000000e+00 : f32
    %8 = vector.broadcast %cst_6 : f32 to vector<8x256xf32>
    %9 = arith.subf %8, %7 : vector<8x256xf32>
    %10 = math.exp %9 : vector<8x256xf32>
    %cst_7 = arith.constant 1.000000e+00 : f32
    %11 = vector.broadcast %cst_7 : f32 to vector<8x256xf32>
    %12 = arith.addf %11, %10 : vector<8x256xf32>
    %13 = tpu.reciprocal %12 {approx = true} : vector<8x256xf32> -> vector<8x256xf32>
    %14 = arith.mulf %7, %13 : vector<8x256xf32>
    %c0_8 = arith.constant 0 : index
    %c0_9 = arith.constant 0 : index
    %c0_10 = arith.constant 0 : index
    %15 = vector.load %arg5[%c0_8, %c0_9, %c0_10] : memref<1x8x256xf32, #tpu.memory_space<vmem>>, vector<1x8x256xf32>
    %16 = vector.shape_cast %15 : vector<1x8x256xf32> to vector<8x256xf32>
    %17 = vector.shape_cast %14 : vector<8x256xf32> to vector<1x8x256xf32>
    tpu.vector_store %arg5[%c0_8, %c0_9, %c0_10], %17 {strides = array<i32>} : memref<1x8x256xf32, #tpu.memory_space<vmem>>, vector<1x8x256xf32>,
    return
  }
  func.func @transform_0(%arg0: i32, %arg1: i32) -> (i32, i32, i32) {
    %c0_i32 = arith.constant 0 : i32
    %c0_i32_0 = arith.constant 0 : i32
    return %arg0, %c0_i32, %arg1 : i32, i32, i32
  }
  func.func @transform_1(%arg0: i32, %arg1: i32) -> (i32, i32) {
    %c0_i32 = arith.constant 0 : i32
    %c0_i32_0 = arith.constant 0 : i32
    %c0_i32_1 = arith.constant 0 : i32
    return %c0_i32, %c0_i32_0 : i32, i32
  }
  func.func @transform_2(%arg0: i32, %arg1: i32) -> (i32, i32) {
    %c0_i32 = arith.constant 0 : i32
    %c0_i32_0 = arith.constant 0 : i32
    %c0_i32_1 = arith.constant 0 : i32
    return %c0_i32, %c0_i32_0 : i32, i32
  }
  func.func @transform_3(%arg0: i32, %arg1: i32) -> (i32, i32, i32) {
    %c0_i32 = arith.constant 0 : i32
    %c0_i32_0 = arith.constant 0 : i32
    return %arg0, %c0_i32, %arg1 : i32, i32, i32
  }
}

</mosaic_0001>

<llo_original>
// kernel: tpu_custom_call.1
$region0: #{tpu_custom_call.1}
  #allocation0 [shape = 'u32[]', space=smem, size = 0x4, offset = 0x4, fixed_abs, tag = 'smem constant byte address 0x4 - core index']
  #allocation1 [shape = 'u32[144,128]{1,0:T(1,128)}', space=vmem, size = 0x12000, scoped, tag = 'internal scratch']
  %s0 = inlined_call_operand.hbm [shape: f32[2,4,256], index: 0, kind: input, shape index: {}]
  %s1 = inlined_call_operand.vmem [shape: bf16[8,4], index: 1, kind: input, shape index: {}]
  %s2 = inlined_call_operand.vmem [shape: f32[8,1], index: 2, kind: input, shape index: {}]
  %s3 = inlined_call_operand.hbm [shape: f32[2,8,256], index: 3, kind: output, shape index: {}]
  %s4 = sld [smem:[#allocation0]]
  $region49: #{tpu_custom_call.1} parent=0
    _
  %s6 = ssub.s32 1, %s4
  %s7 = scalar_select 0, %s6, %s4
  $region1: #{tpu_custom_call.1} parent=0
    #allocation2 [shape = 'u8[8192]{0}', space=vmem, size = 0x2000, scoped, tag = 'input window, operand 0']
    #allocation3 [shape = 's32[2]{0}', space=sflag, size = 0x8, scoped, tag = 'scoped memory for tpu_custom_call.1']
    #allocation4 [shape = 's32[2]{0}', space=sflag, size = 0x8, scoped, tag = 'scoped memory for tpu_custom_call.1']
    #allocation5 [shape = 'u8[16384]{0}', space=vmem, size = 0x4000, scoped, tag = 'output window, operand 0']
    %8 = vsyncpa [#allocation3], 0
    %s9 = scalar_lea.sflag [#allocation3], 1
    %10 = vsyncpa %s9, 0
    %11 = vsyncpa [#allocation4], 0
    %s12 = scalar_lea.sflag [#allocation4], 1
    %13 = vsyncpa %s12, 0
    loop: start=0, step=1, limit=4
    $region2: #{tpu_custom_call.1} parent=1 // loop_pre_header
      _
    $region3: #{tpu_custom_call.1} parent=1 // loop_header
      %s15 = sphi 0, %s19
      %p16 = scmp.ge.s32.totalorder %s15, 4
      %s22 = sphi 0, %s34
      %s23 = sphi 0, %s30
      %s24 = sphi 0, %s22
      %s25 = sphi 0, %s23
      %s26 = sphi 0, %s24
      %s27 = sphi 0, %s25
      %s39 = sphi 0, %s41
      %s42 = sphi 0, %s39
      %s43 = sphi 0, %s42
      %s59 = sphi 0, %s43
      %s63 = sphi 0, %s63
      %s65 = sphi 0, %s63
      %s66 = sphi 0, %s65
      %s80 = sphi 0, %s66
      %s84 = sphi 0, %s84
      %s86 = sphi 0, %s84
      %s87 = sphi 0, %s86
      %s101 = sphi 0, %s87
      %s109 = sphi 0, %s111
      %s112 = sphi 0, %s109
      %s113 = sphi 0, %s112
      %s129 = sphi 0, %s113
    $region4: #{tpu_custom_call.1} parent=1 // loop_header_branch
      %18 = sbr.rel (%p16) target = $region8
    $region5: #{tpu_custom_call.1} parent=1 // loop_body
      %s20 = ssub.s32 %s15, 1
      %s21 = ssub.s32 %s15, 2
      %s28 = sadd.s32 1, %s23
      %p29 = scmp.ge.s32.totalorder %s28, 1
      %s30 = scalar_select %p29, 0, %s28
      %s31 = sadd.s32 1, %s22
      %s32 = scalar_select %p29, %s31, %s22
      %p33 = scmp.ge.s32.totalorder %s32, 2
      %s34 = scalar_select %p33, 0, %s32
      %s35 = ssub.s32 %s22, %s34
      %s36 = ssub.s32 %s23, %s30
      %s37 = sor.u32 %s35, %s36
      %p38 = scmp.eq.s32.totalorder %s37, 0
      %s40 = sadd.s32 %s39, 1
      %s41 = scalar_select %p38, %s39, %s40
      %p44 = pneg %p38
      %p45 = scmp.eq.s32.totalorder %s15, 1
      %p46 = por %p44, %p45
      %p47 = scmp.ne.s32.totalorder %s39, %s42
      %p48 = scmp.eq.s32.totalorder %s15, 0
      %p49 = por %p47, %p48
      %p50 = scmp.ne.s32.totalorder %s39, %s42
      %p51 = scmp.eq.s32.totalorder %s20, 1
      %p52 = por %p50, %p51
      %p53 = scmp.ne.s32.totalorder %s42, %s43
      %p54 = scmp.eq.s32.totalorder %s20, 0
      %p55 = por %p53, %p54
      %p56 = scmp.ne.s32.totalorder %s42, %s43
      %p57 = scmp.eq.s32.totalorder %s21, 1
      %p58 = por %p56, %p57
      %p60 = scmp.ne.s32.totalorder %s43, %s59
      %p61 = scmp.eq.s32.totalorder %s21, 0
      %p62 = por %p60, %p61
      %s64 = sadd.s32 %s63, 1
      %p67 = scmp.eq.s32.totalorder %s15, 1
      %p68 = scmp.ne.s32.totalorder %s63, %s65
      %p69 = scmp.eq.s32.totalorder %s15, 0
      %p70 = por %p68, %p69
      %p71 = scmp.ne.s32.totalorder %s63, %s65
      %p72 = scmp.eq.s32.totalorder %s20, 1
      %p73 = por %p71, %p72
      %p74 = scmp.ne.s32.totalorder %s65, %s66
      %p75 = scmp.eq.s32.totalorder %s20, 0
      %p76 = por %p74, %p75
      %p77 = scmp.ne.s32.totalorder %s65, %s66
      %p78 = scmp.eq.s32.totalorder %s21, 1
      %p79 = por %p77, %p78
      %p81 = scmp.ne.s32.totalorder %s66, %s80
      %p82 = scmp.eq.s32.totalorder %s21, 0
      %p83 = por %p81, %p82
      %s85 = sadd.s32 %s84, 1
      %p88 = scmp.eq.s32.totalorder %s15, 1
      %p89 = scmp.ne.s32.totalorder %s84, %s86
      %p90 = scmp.eq.s32.totalorder %s15, 0
      %p91 = por %p89, %p90
      %p92 = scmp.ne.s32.totalorder %s84, %s86
      %p93 = scmp.eq.s32.totalorder %s20, 1
      %p94 = por %p92, %p93
      %p95 = scmp.ne.s32.totalorder %s86, %s87
      %p96 = scmp.eq.s32.totalorder %s20, 0
      %p97 = por %p95, %p96
      %p98 = scmp.ne.s32.totalorder %s86, %s87
      %p99 = scmp.eq.s32.totalorder %s21, 1
      %p100 = por %p98, %p99
      %p102 = scmp.ne.s32.totalorder %s87, %s101
      %p103 = scmp.eq.s32.totalorder %s21, 0
      %p104 = por %p102, %p103
      %s105 = ssub.s32 %s22, %s34
      %s106 = ssub.s32 %s23, %s30
      %s107 = sor.u32 %s105, %s106
      %p108 = scmp.eq.s32.totalorder %s107, 0
      %s110 = sadd.s32 %s109, 1
      %s111 = scalar_select %p108, %s109, %s110
      %p114 = pneg %p108
      %p115 = scmp.eq.s32.totalorder %s15, 1
      %p116 = por %p114, %p115
      %p117 = scmp.ne.s32.totalorder %s109, %s112
      %p118 = scmp.eq.s32.totalorder %s15, 0
      %p119 = por %p117, %p118
      %p120 = scmp.ne.s32.totalorder %s109, %s112
      %p121 = scmp.eq.s32.totalorder %s20, 1
      %p122 = por %p120, %p121
      %p123 = scmp.ne.s32.totalorder %s112, %s113
      %p124 = scmp.eq.s32.totalorder %s20, 0
      %p125 = por %p123, %p124
      %p126 = scmp.ne.s32.totalorder %s112, %s113
      %p127 = scmp.eq.s32.totalorder %s21, 1
      %p128 = por %p126, %p127
      %p130 = scmp.ne.s32.totalorder %s113, %s129
      %p131 = scmp.eq.s32.totalorder %s21, 0
      %p132 = por %p130, %p131
      %p133 = scmp.le.s32.totalorder 1, %s15
      %p134 = scmp.lt.s32.totalorder %s15, 3
      %p135 = pnand %p133, %p134
      %p136 = pneg %p135
      // Predicated region
      $region9: #{tpu_custom_call.1} parent=5 // pred_check
        _
      $region10: #{tpu_custom_call.1} parent=5 // pred_check_branch
        %138 = sbr.rel (%p135) target = $region12
      $region11: #{tpu_custom_call.1} parent=5 // pred_region
        %s139 = ssub.s32 %s15, 1
        // Predicated region
        $region13: #{tpu_custom_call.1} parent=11 // pred_check
          %p140 = pneg %p76
        $region14: #{tpu_custom_call.1} parent=11 // pred_check_branch
          %142 = sbr.rel (%p140) target = $region16
        $region15: #{tpu_custom_call.1} parent=11 // pred_region
          _
        $region16: #{tpu_custom_call.1} parent=11 // pred_fallthru
          _
        // Predicated region
        $region17: #{tpu_custom_call.1} parent=11 // pred_check
          %p143 = pneg %p97
        $region18: #{tpu_custom_call.1} parent=11 // pred_check_branch
          %145 = sbr.rel (%p143) target = $region20
        $region19: #{tpu_custom_call.1} parent=11 // pred_region
          _
        $region20: #{tpu_custom_call.1} parent=11 // pred_fallthru
          _
      $region12: #{tpu_custom_call.1} parent=5 // pred_fallthru
        _
      %p146 = scmp.lt.s32.totalorder %s15, 2
      // Predicated region
      $region21: #{tpu_custom_call.1} parent=5 // pred_check
        %p147 = pneg %p146
      $region22: #{tpu_custom_call.1} parent=5 // pred_check_branch
        %149 = sbr.rel (%p147) target = $region24
      $region23: #{tpu_custom_call.1} parent=5 // pred_region
        // Predicated region
        $region25: #{tpu_custom_call.1} parent=23 // pred_check
          %p150 = pneg %p49
        $region26: #{tpu_custom_call.1} parent=23 // pred_check_branch
          %152 = sbr.rel (%p150) target = $region28
        $region27: #{tpu_custom_call.1} parent=23 // pred_region
          %s153 = sand.u32 %s39, 1
          %s154 = scalar_lea.sflag [#allocation3], %s153
          %s155 = sand.u32 %s39, 1
          %s156 = smul.addr %s155, 8
          %s157 = scalar_lea.vmem [#allocation2], %s156
          %s158 = smul.u32 2, %s23
          %s160 = ssub.s32 128, 128
          %161 = vsyncadd %s154, %s160
          %s162 = smul.addr %s22, 2
          %s163 = sadd.s32 %s158, %s162
          %s164 = smul.addr %s163, 64
          %s165 = scalar_lea.hbm %s0, %s164
          %s167 = sshll.u32 %s157, 4
          %s168 = int_to_ptr.vmem [resolvable:$true] %s167
          %170 = dma.hbm_to_vmem [thread:$0]  %s165, 128, %s168, %s154
        $region28: #{tpu_custom_call.1} parent=23 // pred_fallthru
          _
      $region24: #{tpu_custom_call.1} parent=5 // pred_fallthru
        _
      %p171 = scmp.le.s32.totalorder 1, %s15
      %p172 = scmp.lt.s32.totalorder %s15, 3
      %p173 = pnand %p171, %p172
      %p174 = pneg %p173
      // Predicated region
      $region29: #{tpu_custom_call.1} parent=5 // pred_check
        _
      $region30: #{tpu_custom_call.1} parent=5 // pred_check_branch
        %176 = sbr.rel (%p173) target = $region32
      $region31: #{tpu_custom_call.1} parent=5 // pred_region
        %s177 = ssub.s32 %s15, 1
        %s178 = sand.u32 %s42, 1
        %s179 = scalar_lea.sflag [#allocation3], %s178
        %s180 = sand.u32 %s42, 1
        %s181 = smul.addr %s180, 8
        %s182 = scalar_lea.vmem [#allocation2], %s181
        // Predicated region
        $region33: #{tpu_custom_call.1} parent=31 // pred_check
          %p183 = pneg %p55
        $region34: #{tpu_custom_call.1} parent=31 // pred_check_branch
          %185 = sbr.rel (%p183) target = $region36
        $region35: #{tpu_custom_call.1} parent=31 // pred_region
          %186 = dma.done %s179, 128
        $region36: #{tpu_custom_call.1} parent=31 // pred_fallthru
          _
        %s187 = sand.u32 %s42, 1
        %s188 = scalar_lea.sflag [#allocation3], %s187
        %s189 = sand.u32 %s42, 1
        %s190 = smul.addr %s189, 8
        %s191 = scalar_lea.vmem [#allocation2], %s190
        %p192 = pneg %p55
        %p193 = pneg %p52
        %p194 = pneg %p76
        %p195 = pneg %p73
        %p196 = pneg %p97
        %p197 = pneg %p94
        %p198 = pneg %p125
        %p199 = pneg %p122
        %s200 = sand.u32 %s112, 1
        %s201 = scalar_lea.sflag [#allocation4], %s200
        %s202 = sand.u32 %s112, 1
        %s203 = smul.addr %s202, 16
        %s204 = scalar_lea.vmem [#allocation5], %s203
        %s205 = smul.u32 2, %s25
        %s206 = smul.u32 2, %s25
        %v208 = vld [vmem:[%s182] sm:$0xff]
        %v210 = vcombine.high %v208, %v208
        %v212 = vpack.c.bf16 %v208, %v208
        %v213 = vpack.c.bf16 %v210, %v210
        %v214 = vld [vmem:[%s1] sm:$0xf]
        %v215 = vld [vmem:[%s2] sm:$0xff]
        %217 = vset.pattern.permute.xlu0 0
        %218 = vperm.xlu0 %217, %v215
        %v219 = vpop.permute.xlu0 %218
        %vm221 = vcmask 31744
        %v223 = vsel %vm221, %v214, 0
        %vm225 = vcmask 1041408
        %v227 = vsel %vm225, %v212, 0
        %v230 = vsel %vm225, %v213, 0
        %232 = vmatprep.subr.bf16.mxu0 0
        %233 = vmatpush1.bf16.msra.mxu0 0
        %234 = vmatprep.subr.bf16.mxu0 0
        %235 = vmatpush1.bf16.msra.mxu0 0
        %236 = vmatprep.subr.bf16.mxu0 0
        %237 = vmatpush1.bf16.msra.mxu0 0
        %238 = vmatprep.subr.bf16.mxu0 0
        %239 = vmatpush1.bf16.msra.mxu0 0
        %240 = vmatprep.subr.bf16.mxu0 0
        %241 = vmatpush1.bf16.msra.mxu0 0
        %242 = vmatprep.subr.bf16.mxu0 0
        %243 = vmatpush1.bf16.msra.mxu0 0
        %244 = vmatprep.subr.bf16.mxu0 0
        %245 = vmatpush1.bf16.msra.mxu0 0
        %246 = vmatprep.subr.bf16.mxu0 %v230
        %247 = vmatpush1.bf16.msra.mxu0 %v227
        %248 = vmatprep.subr.bf16.mxu0 0
        %249 = vmatpush2.bf16.msra.mxu0 0
        %250 = vmatprep.subr.bf16.mxu0 0
        %251 = vmatpush2.bf16.msra.mxu0 0
        %252 = vmatprep.subr.bf16.mxu0 0
        %253 = vmatpush2.bf16.msra.mxu0 0
        %254 = vmatprep.subr.bf16.mxu0 0
        %255 = vmatpush2.bf16.msra.mxu0 0
        %256 = vmatprep.subr.bf16.mxu0 0
        %257 = vmatpush2.bf16.msra.mxu0 0
        %258 = vmatprep.subr.bf16.mxu0 0
        %259 = vmatpush2.bf16.msra.mxu0 0
        %260 = vmatprep.subr.bf16.mxu0 0
        %261 = vmatpush2.bf16.msra.mxu0 0
        %262 = vmatprep.subr.bf16.mxu0 0
        %263 = vmatpush2.bf16.msra.mxu0 0
        %264 = vmatprep.mubr.bf16.mxu0 0
        %265 = vmatmul.mubr.bf16.gmra.mxu0 %v223
        %v266 = vpop.f32.mrf.mxu0
        %v267 = vadd.f32 %v219, %v266
        %v268 = vpop.f32.mrf.mxu0
        %v269 = vadd.f32 %v219, %v268
        %v270 = vpop.f32.mrf.mxu0
        %v271 = vpop.f32.mrf.mxu0
        %272 = vdwg.mxu0
        %v273 = vsub.f32 0.0, %v267
        %v274 = vsub.f32 0.0, %v269
        %v275 = vmul.f32 %v273, 1.442695
        %v276 = vpow.pop %v275
        %v277 = vmul.f32 %v274, 1.442695
        %v278 = vpow.pop %v277
        %v279 = vadd.f32 %v276, 1.0
        %v280 = vadd.f32 %v278, 1.0
        %v281 = vrcp.pop %v279
        %v282 = vrcp.pop %v280
        %v283 = vmul.f32 %v267, %v281
        %v284 = vmul.f32 %v269, %v282
        %285 = vst [vmem:[%s204] sm:$0xff] %v283
        %286 = vst [vmem:[%s204 + $0x8] sm:$0xff] %v284
        %s287 = sand.u32 %s112, 1
        %s288 = scalar_lea.sflag [#allocation4], %s287
        %s289 = sand.u32 %s112, 1
        %s290 = smul.addr %s289, 16
        %s291 = scalar_lea.vmem [#allocation5], %s290
        // Predicated region
        $region37: #{tpu_custom_call.1} parent=31 // pred_check
          %p292 = pneg %p122
        $region38: #{tpu_custom_call.1} parent=31 // pred_check_branch
          %294 = sbr.rel (%p292) target = $region40
        $region39: #{tpu_custom_call.1} parent=31 // pred_region
          %s295 = smul.u32 2, %s25
          %s297 = ssub.s32 256, 256
          %298 = vsyncadd %s288, %s297
          %s299 = smul.addr %s24, 2
          %s300 = sadd.s32 %s295, %s299
          %s301 = smul.addr %s300, 128
          %s302 = scalar_lea.hbm %s3, %s301
          %s304 = sshll.u32 %s291, 4
          %s305 = int_to_ptr.vmem [resolvable:$true] %s304
          %307 = dma.vmem_to_hbm [thread:$0]  %s305, 256, %s302, %s288
        $region40: #{tpu_custom_call.1} parent=31 // pred_fallthru
          _
      $region32: #{tpu_custom_call.1} parent=5 // pred_fallthru
        _
      %p308 = scmp.le.s32.totalorder 2, %s15
      // Predicated region
      $region41: #{tpu_custom_call.1} parent=5 // pred_check
        %p309 = pneg %p308
      $region42: #{tpu_custom_call.1} parent=5 // pred_check_branch
        %311 = sbr.rel (%p309) target = $region44
      $region43: #{tpu_custom_call.1} parent=5 // pred_region
        %s312 = ssub.s32 %s15, 2
        // Predicated region
        $region45: #{tpu_custom_call.1} parent=43 // pred_check
          %p313 = pneg %p128
        $region46: #{tpu_custom_call.1} parent=43 // pred_check_branch
          %315 = sbr.rel (%p313) target = $region48
        $region47: #{tpu_custom_call.1} parent=43 // pred_region
          %s316 = sand.u32 %s113, 1
          %s317 = scalar_lea.sflag [#allocation4], %s316
          %s318 = sand.u32 %s113, 1
          %s319 = smul.addr %s318, 16
          %s320 = scalar_lea.vmem [#allocation5], %s319
          %321 = dma.done %s317, 256
        $region48: #{tpu_custom_call.1} parent=43 // pred_fallthru
          _
      $region44: #{tpu_custom_call.1} parent=5 // pred_fallthru
        _
    $region6: #{tpu_custom_call.1} parent=1 // loop_footer
      %s19 = sadd.s32 1, %s15
    $region7: #{tpu_custom_call.1} parent=1 // loop_footer_branch
      %14 = sbr.rel target = $region3
    $region8: #{tpu_custom_call.1} parent=1 // loop_exit
      _
    %322 = vsyncpa [#allocation3], 1
    %s323 = scalar_lea.sflag [#allocation3], 1
    %324 = vsyncpa %s323, 1
    %325 = vsyncpa [#allocation4], 1
    %s326 = scalar_lea.sflag [#allocation4], 1
    %327 = vsyncpa %s326, 1

</llo_original>
